<compile_context>
chip_gen: v6e
topology: v6e:2x2x1
jax: 0.10.0
libtpu: 0.0.40
codegen_flags: <defaults>
</compile_context>

<pallas_src>
import functools

import numpy as np
import jax
import jax.numpy as jnp
from jax.experimental import pallas as pl
from jax.experimental.pallas import tpu as pltpu

STUDENT_TEMP = 0.1
CENTER_MOMENTUM = 0.9
_NEG_PAD = -1e30  # padding value for logit lanes beyond the real feature dim


def _dino_loss_kernel(student_ref, teacher_ref, center_ref,      # inputs
                      loss_ref, new_center_ref,                  # outputs
                      loss_acc, tsum_acc,                        # VMEM scratch
                      *, ncrops, batch, inv_t_temp, inv_s_temp, center_momentum):
    b = pl.program_id(0)
    nb = pl.num_programs(0)

    @pl.when(b == 0)
    def _():
        loss_acc[...] = jnp.zeros_like(loss_acc)
        tsum_acc[...] = jnp.zeros_like(tsum_acc)

    c = center_ref[...].astype(jnp.float32)                      # (1, Dp)

    # ---- teacher: softmax((teacher - center) * inv_temp, axis=-1) ----
    t0 = teacher_ref[0].astype(jnp.float32)                      # (TB, Dp)
    t1 = teacher_ref[1].astype(jnp.float32)

    def _teacher_softmax(t):
        z = (t - c) * inv_t_temp
        z = z - jnp.max(z, axis=-1, keepdims=True)
        e = jnp.exp(z)
        denom = jnp.sum(e, axis=-1, keepdims=True)               # (TB, 1)
        return e * (1.0 / denom)                                 # small-vector divide only

    q0 = _teacher_softmax(t0)
    q1 = _teacher_softmax(t1)
    q_sum = q0 + q1

    # ---- student views: accumulate CE without materializing log_p ----
    # per row, per pair:  -sum(q * log_p) = lse * sum(q) - sum(q * s)
    acc_d = jnp.zeros_like(q0)                                   # (TB, Dp)  VALU accumulator
    acc_lse = jnp.zeros((q0.shape[0], 1), jnp.float32)           # (TB, 1)
    for v in range(ncrops):
        s = student_ref[v].astype(jnp.float32) * inv_s_temp      # (TB, Dp)
        m = jnp.max(s, axis=-1, keepdims=True)
        lse = m + jnp.log(jnp.sum(jnp.exp(s - m), axis=-1, keepdims=True))
        if v == 0:
            q_eff, w = q1, 1.0        # only teacher view 1 pairs with student view 0
        elif v == 1:
            q_eff, w = q0, 1.0        # only teacher view 0 pairs with student view 1
        else:
            q_eff, w = q_sum, 2.0     # both teacher views pair with this student view
        acc_d = acc_d + q_eff * s
        acc_lse = acc_lse + w * lse

    # one lane reduction for all pairs, then a sublane reduction over tile rows
    row_ce = acc_lse - jnp.sum(acc_d, axis=-1, keepdims=True)    # (TB, 1)
    loss_acc[...] += jnp.sum(row_ce, axis=0, keepdims=True)      # (1, 1)

    # ---- teacher-output sum for the center EMA update ----
    tsum_acc[...] += (jnp.sum(t0, axis=0, keepdims=True)
                      + jnp.sum(t1, axis=0, keepdims=True))      # (1, Dp)

    @pl.when(b == nb - 1)
    def _():
        n_terms = 2 * (ncrops - 1)
        loss_ref[...] = loss_acc[...] * (1.0 / (batch * n_terms))
        batch_center = tsum_acc[...] * (1.0 / (2 * batch))
        new_center_ref[...] = (c * center_momentum
                               + batch_center * (1.0 - center_momentum))
        # TODO(synk): the PyTorch update_center all-reduces batch_center across
        # data-parallel replicas; this single-device kernel omits that.


def _choose_batch_tile(batch, ncrops, d_pad, max_batch_tile=None):
    # live f32 bytes per tile row: 2x double-buffered (ncrops+2) input slabs
    # plus ~6 row-sized intermediates (q0, q1, q_sum, acc_d, s, exp tmp).
    per_row = (2 * (ncrops + 2) + 6) * d_pad * 4
    cap = max(1, (24 * 2 ** 20) // per_row)                      # ~24 MiB live budget
    if max_batch_tile is not None:
        cap = min(cap, max_batch_tile)
    best = batch                                                 # fallback: single tile
    for cand in range(min(cap, batch), 7, -1):
        if cand % 8 == 0 and batch % cand == 0:
            best = cand
            break
    return best


def dino_loss(student_output, teacher_output, center, temp, *, ncrops,
              student_temp=STUDENT_TEMP, center_momentum=CENTER_MOMENTUM,
              max_batch_tile=None):
    total_s, d = student_output.shape
    assert total_s % ncrops == 0
    batch = total_s // ncrops
    assert teacher_output.shape == (2 * batch, d)

    d_pad = ((d + 127) // 128) * 128

    def _pad_feat(x, value):
        if d_pad == d:
            return x
        return jnp.pad(x, ((0, 0), (0, d_pad - d)), constant_values=value)

    student = _pad_feat(student_output, _NEG_PAD).reshape(ncrops, batch, d_pad)
    teacher = _pad_feat(teacher_output, _NEG_PAD).reshape(2, batch, d_pad)
    center_p = _pad_feat(center, 0.0)                            # (1, d_pad)

    tb = _choose_batch_tile(batch, ncrops, d_pad, max_batch_tile)
    grid = (batch // tb,)

    per_step_bytes = ((ncrops + 2) * tb * d_pad + d_pad) * 4
    interm_bytes = 6 * tb * d_pad * 4
    vmem_limit = int(min(64 * 2 ** 20,
                         max(8 * 2 ** 20, 2 * per_step_bytes + interm_bytes + (1 << 20))))

    kernel = functools.partial(
        _dino_loss_kernel,
        ncrops=ncrops, batch=batch,
        inv_t_temp=float(1.0 / temp),
        inv_s_temp=float(1.0 / student_temp),
        center_momentum=float(center_momentum))

    loss, new_center = pl.pallas_call(
        kernel,
        grid=grid,
        out_shape=(jax.ShapeDtypeStruct((1, 1), jnp.float32),
                   jax.ShapeDtypeStruct((1, d_pad), jnp.float32)),
        in_specs=[
            pl.BlockSpec((ncrops, tb, d_pad), lambda b: (0, b, 0)),  # student views
            pl.BlockSpec((2, tb, d_pad), lambda b: (0, b, 0)),       # teacher views
            pl.BlockSpec((1, d_pad), lambda b: (0, 0)),              # center
        ],
        out_specs=(
            pl.BlockSpec((1, 1), lambda b: (0, 0)),                  # loss
            pl.BlockSpec((1, d_pad), lambda b: (0, 0)),              # new center
        ),
        scratch_shapes=[pltpu.VMEM((1, 1), jnp.float32),             # loss accumulator
                        pltpu.VMEM((1, d_pad), jnp.float32)],        # teacher-sum accumulator
        compiler_params=pltpu.CompilerParams(
            dimension_semantics=("arbitrary",),   # grid axis is a reduction axis
            vmem_limit_bytes=vmem_limit),
    )(student, teacher, center_p)

    return loss[0, 0], new_center[:, :d]


if __name__ == "__main__":
    # Module hyper-parameters (small, deterministic)
    out_dim = 32          # padded to 128 lanes inside the wrapper
    ncrops = 4
    batch = 16            # with max_batch_tile=8 -> 2 grid steps (exercises accumulation)
    warmup_teacher_temp, teacher_temp = 0.04, 0.07
    warmup_teacher_temp_epochs, nepochs = 3, 10
    epoch = 1

    teacher_temp_schedule = np.concatenate((
        np.linspace(warmup_teacher_temp, teacher_temp, warmup_teacher_temp_epochs),
        np.ones(nepochs - warmup_teacher_temp_epochs) * teacher_temp))
    temp = float(teacher_temp_schedule[epoch])
    center = jnp.zeros((1, out_dim), jnp.float32)

    key = jax.random.PRNGKey(0)
    k1, k2 = jax.random.split(key)
    student_output = jax.random.normal(k1, (ncrops * batch, out_dim), jnp.float32)
    teacher_output = jax.random.normal(k2, (2 * batch, out_dim), jnp.float32)

    loss, new_center = dino_loss(student_output, teacher_output, center, temp,
                                 ncrops=ncrops, max_batch_tile=8)
    jax.block_until_ready((loss, new_center))

    # Plain-JAX reference (mirrors the PyTorch forward exactly)
    def ref(student_output, teacher_output, center, temp):
        s = student_output / STUDENT_TEMP
        s_chunks = jnp.split(s, ncrops, axis=0)
        t = jax.nn.softmax((teacher_output - center) / temp, axis=-1)
        t_chunks = jnp.split(t, 2, axis=0)
        total, n = 0.0, 0
        for iq, qq in enumerate(t_chunks):
            for v in range(ncrops):
                if v == iq:
                    continue
                l = jnp.sum(-qq * jax.nn.log_softmax(s_chunks[v], axis=-1), axis=-1)
                total = total + l.mean()
                n += 1
        total = total / n
        bc = jnp.sum(teacher_output, axis=0, keepdims=True) / teacher_output.shape[0]
        nc = center * CENTER_MOMENTUM + bc * (1.0 - CENTER_MOMENTUM)
        return total, nc

    ref_loss, ref_center = ref(student_output, teacher_output, center, temp)
    assert np.allclose(np.asarray(loss), np.asarray(ref_loss), rtol=1e-4, atol=1e-5), \
        (loss, ref_loss)
    assert np.allclose(np.asarray(new_center), np.asarray(ref_center),
                       rtol=1e-4, atol=1e-5)
    print("KERNEL_OK")
</pallas_src>

<mosaic_0001>
module attributes {stable_mosaic.version = 11 : i64} {
  func.func @_dino_loss_kernel(%arg0: i32, %arg1: memref<4x8x128xf32, #tpu.memory_space<vmem>>, %arg2: memref<2x8x128xf32, #tpu.memory_space<vmem>>, %arg3: memref<1x128xf32, #tpu.memory_space<vmem>>, %arg4: memref<1x1xf32, #tpu.memory_space<vmem>>, %arg5: memref<1x128xf32, #tpu.memory_space<vmem>>, %arg6: memref<1x1xf32, #tpu.memory_space<vmem>>, %arg7: memref<1x128xf32, #tpu.memory_space<vmem>>) attributes {dimension_semantics = [#tpu.dimension_semantics<arbitrary>], iteration_bounds = array<i64: 2>, scalar_prefetch = 0 : i64, scratch_operands = 2 : i64, tpu.core_type = #tpu.core_type<tc>, window_params = [{transform_indices = @transform_0, window_bounds = array<i64: 4, 8, 128>}, {transform_indices = @transform_1, window_bounds = array<i64: 2, 8, 128>}, {pipeline_mode = #tpu.pipeline_mode<synchronous>, transform_indices = @transform_2, window_bounds = array<i64: 1, 128>}, {pipeline_mode = #tpu.pipeline_mode<synchronous>, transform_indices = @transform_3, window_bounds = array<i64: 1, 1>}, {pipeline_mode = #tpu.pipeline_mode<synchronous>, transform_indices = @transform_4, window_bounds = array<i64: 1, 128>}]} {
    %c0_i32 = arith.constant 0 : i32
    %0 = arith.cmpi eq, %arg0, %c0_i32 : i32
    %1 = arith.extui %0 : i1 to i32
    %c0_i32_0 = arith.constant 0 : i32
    %2 = arith.cmpi ne, %1, %c0_i32_0 : i32
    scf.if %2 {
      %cst_55 = arith.constant 0.000000e+00 : f32
      %132 = vector.broadcast %cst_55 : f32 to vector<1x1xf32>
      %c0_56 = arith.constant 0 : index
      %c0_57 = arith.constant 0 : index
      %133 = vector.load %arg6[%c0_56, %c0_57] : memref<1x1xf32, #tpu.memory_space<vmem>>, vector<1x1xf32>
      tpu.vector_store %arg6[%c0_56, %c0_57], %132 {strides = array<i32>} : memref<1x1xf32, #tpu.memory_space<vmem>>, vector<1x1xf32>,
      %cst_58 = arith.constant 0.000000e+00 : f32
      %134 = vector.broadcast %cst_58 : f32 to vector<1x128xf32>
      %c0_59 = arith.constant 0 : index
      %c0_60 = arith.constant 0 : index
      %135 = vector.load %arg7[%c0_59, %c0_60] : memref<1x128xf32, #tpu.memory_space<vmem>>, vector<1x128xf32>
      tpu.vector_store %arg7[%c0_59, %c0_60], %134 {strides = array<i32>} : memref<1x128xf32, #tpu.memory_space<vmem>>, vector<1x128xf32>,
    } else {
    }
    %c0 = arith.constant 0 : index
    %c0_1 = arith.constant 0 : index
    %3 = vector.load %arg3[%c0, %c0_1] : memref<1x128xf32, #tpu.memory_space<vmem>>, vector<1x128xf32>
    %c0_2 = arith.constant 0 : index
    %c0_3 = arith.constant 0 : index
    %c0_4 = arith.constant 0 : index
    %4 = vector.load %arg2[%c0_2, %c0_3, %c0_4] : memref<2x8x128xf32, #tpu.memory_space<vmem>>, vector<1x8x128xf32>
    %5 = vector.shape_cast %4 : vector<1x8x128xf32> to vector<8x128xf32>
    %c1 = arith.constant 1 : index
    %c0_5 = arith.constant 0 : index
    %c0_6 = arith.constant 0 : index
    %6 = vector.load %arg2[%c1, %c0_5, %c0_6] : memref<2x8x128xf32, #tpu.memory_space<vmem>>, vector<1x8x128xf32>
    %7 = vector.shape_cast %6 : vector<1x8x128xf32> to vector<8x128xf32>
    %8 = vector.broadcast %3 : vector<1x128xf32> to vector<8x128xf32>
    %9 = arith.subf %5, %8 : vector<8x128xf32>
    %cst = arith.constant 18.181818 : f32
    %10 = vector.broadcast %cst : f32 to vector<8x128xf32>
    %11 = arith.mulf %9, %10 : vector<8x128xf32>
    %cst_7 = arith.constant dense<0xFF800000> : vector<8xf32>
    %12 = vector.multi_reduction <maximumf>, %11, %cst_7 [1] : vector<8x128xf32> to vector<8xf32>
    %13 = vector.shape_cast %12 : vector<8xf32> to vector<8x1xf32>
    %14 = vector.broadcast %13 : vector<8x1xf32> to vector<8x128xf32>
    %15 = arith.subf %11, %14 : vector<8x128xf32>
    %16 = math.exp %15 : vector<8x128xf32>
    %cst_8 = arith.constant dense<0.000000e+00> : vector<8xf32>
    %17 = vector.multi_reduction <add>, %16, %cst_8 [1] : vector<8x128xf32> to vector<8xf32>
    %18 = vector.shape_cast %17 : vector<8xf32> to vector<8x1xf32>
    %cst_9 = arith.constant 1.000000e+00 : f32
    %19 = vector.broadcast %cst_9 : f32 to vector<8x1xf32>
    %20 = arith.divf %19, %18 : vector<8x1xf32>
    %21 = vector.broadcast %20 : vector<8x1xf32> to vector<8x128xf32>
    %22 = arith.mulf %16, %21 : vector<8x128xf32>
    %23 = vector.broadcast %3 : vector<1x128xf32> to vector<8x128xf32>
    %24 = arith.subf %7, %23 : vector<8x128xf32>
    %cst_10 = arith.constant 18.181818 : f32
    %25 = vector.broadcast %cst_10 : f32 to vector<8x128xf32>
    %26 = arith.mulf %24, %25 : vector<8x128xf32>
    %cst_11 = arith.constant dense<0xFF800000> : vector<8xf32>
    %27 = vector.multi_reduction <maximumf>, %26, %cst_11 [1] : vector<8x128xf32> to vector<8xf32>
    %28 = vector.shape_cast %27 : vector<8xf32> to vector<8x1xf32>
    %29 = vector.broadcast %28 : vector<8x1xf32> to vector<8x128xf32>
    %30 = arith.subf %26, %29 : vector<8x128xf32>
    %31 = math.exp %30 : vector<8x128xf32>
    %cst_12 = arith.constant dense<0.000000e+00> : vector<8xf32>
    %32 = vector.multi_reduction <add>, %31, %cst_12 [1] : vector<8x128xf32> to vector<8xf32>
    %33 = vector.shape_cast %32 : vector<8xf32> to vector<8x1xf32>
    %cst_13 = arith.constant 1.000000e+00 : f32
    %34 = vector.broadcast %cst_13 : f32 to vector<8x1xf32>
    %35 = arith.divf %34, %33 : vector<8x1xf32>
    %36 = vector.broadcast %35 : vector<8x1xf32> to vector<8x128xf32>
    %37 = arith.mulf %31, %36 : vector<8x128xf32>
    %38 = arith.addf %22, %37 : vector<8x128xf32>
    %cst_14 = arith.constant 0.000000e+00 : f32
    %39 = vector.broadcast %cst_14 : f32 to vector<8x128xf32>
    %cst_15 = arith.constant 0.000000e+00 : f32
    %40 = vector.broadcast %cst_15 : f32 to vector<8x1xf32>
    %c0_16 = arith.constant 0 : index
    %c0_17 = arith.constant 0 : index
    %c0_18 = arith.constant 0 : index
    %41 = vector.load %arg1[%c0_16, %c0_17, %c0_18] : memref<4x8x128xf32, #tpu.memory_space<vmem>>, vector<1x8x128xf32>
    %42 = vector.shape_cast %41 : vector<1x8x128xf32> to vector<8x128xf32>
    %cst_19 = arith.constant 1.000000e+01 : f32
    %43 = vector.broadcast %cst_19 : f32 to vector<8x128xf32>
    %44 = arith.mulf %42, %43 : vector<8x128xf32>
    %cst_20 = arith.constant dense<0xFF800000> : vector<8xf32>
    %45 = vector.multi_reduction <maximumf>, %44, %cst_20 [1] : vector<8x128xf32> to vector<8xf32>
    %46 = vector.shape_cast %45 : vector<8xf32> to vector<8x1xf32>
    %47 = vector.broadcast %46 : vector<8x1xf32> to vector<8x128xf32>
    %48 = arith.subf %44, %47 : vector<8x128xf32>
    %49 = math.exp %48 : vector<8x128xf32>
    %cst_21 = arith.constant dense<0.000000e+00> : vector<8xf32>
    %50 = vector.multi_reduction <add>, %49, %cst_21 [1] : vector<8x128xf32> to vector<8xf32>
    %51 = vector.shape_cast %50 : vector<8xf32> to vector<8x1xf32>
    %52 = math.log %51 : vector<8x1xf32>
    %53 = arith.addf %46, %52 : vector<8x1xf32>
    %54 = arith.mulf %37, %44 : vector<8x128xf32>
    %55 = arith.addf %39, %54 : vector<8x128xf32>
    %cst_22 = arith.constant 1.000000e+00 : f32
    %56 = vector.broadcast %cst_22 : f32 to vector<8x1xf32>
    %57 = arith.mulf %56, %53 : vector<8x1xf32>
    %58 = arith.addf %40, %57 : vector<8x1xf32>
    %c1_23 = arith.constant 1 : index
    %c0_24 = arith.constant 0 : index
    %c0_25 = arith.constant 0 : index
    %59 = vector.load %arg1[%c1_23, %c0_24, %c0_25] : memref<4x8x128xf32, #tpu.memory_space<vmem>>, vector<1x8x128xf32>
    %60 = vector.shape_cast %59 : vector<1x8x128xf32> to vector<8x128xf32>
    %cst_26 = arith.constant 1.000000e+01 : f32
    %61 = vector.broadcast %cst_26 : f32 to vector<8x128xf32>
    %62 = arith.mulf %60, %61 : vector<8x128xf32>
    %cst_27 = arith.constant dense<0xFF800000> : vector<8xf32>
    %63 = vector.multi_reduction <maximumf>, %62, %cst_27 [1] : vector<8x128xf32> to vector<8xf32>
    %64 = vector.shape_cast %63 : vector<8xf32> to vector<8x1xf32>
    %65 = vector.broadcast %64 : vector<8x1xf32> to vector<8x128xf32>
    %66 = arith.subf %62, %65 : vector<8x128xf32>
    %67 = math.exp %66 : vector<8x128xf32>
    %cst_28 = arith.constant dense<0.000000e+00> : vector<8xf32>
    %68 = vector.multi_reduction <add>, %67, %cst_28 [1] : vector<8x128xf32> to vector<8xf32>
    %69 = vector.shape_cast %68 : vector<8xf32> to vector<8x1xf32>
    %70 = math.log %69 : vector<8x1xf32>
    %71 = arith.addf %64, %70 : vector<8x1xf32>
    %72 = arith.mulf %22, %62 : vector<8x128xf32>
    %73 = arith.addf %55, %72 : vector<8x128xf32>
    %cst_29 = arith.constant 1.000000e+00 : f32
    %74 = vector.broadcast %cst_29 : f32 to vector<8x1xf32>
    %75 = arith.mulf %74, %71 : vector<8x1xf32>
    %76 = arith.addf %58, %75 : vector<8x1xf32>
    %c2 = arith.constant 2 : index
    %c0_30 = arith.constant 0 : index
    %c0_31 = arith.constant 0 : index
    %77 = vector.load %arg1[%c2, %c0_30, %c0_31] : memref<4x8x128xf32, #tpu.memory_space<vmem>>, vector<1x8x128xf32>
    %78 = vector.shape_cast %77 : vector<1x8x128xf32> to vector<8x128xf32>
    %cst_32 = arith.constant 1.000000e+01 : f32
    %79 = vector.broadcast %cst_32 : f32 to vector<8x128xf32>
    %80 = arith.mulf %78, %79 : vector<8x128xf32>
    %cst_33 = arith.constant dense<0xFF800000> : vector<8xf32>
    %81 = vector.multi_reduction <maximumf>, %80, %cst_33 [1] : vector<8x128xf32> to vector<8xf32>
    %82 = vector.shape_cast %81 : vector<8xf32> to vector<8x1xf32>
    %83 = vector.broadcast %82 : vector<8x1xf32> to vector<8x128xf32>
    %84 = arith.subf %80, %83 : vector<8x128xf32>
    %85 = math.exp %84 : vector<8x128xf32>
    %cst_34 = arith.constant dense<0.000000e+00> : vector<8xf32>
    %86 = vector.multi_reduction <add>, %85, %cst_34 [1] : vector<8x128xf32> to vector<8xf32>
    %87 = vector.shape_cast %86 : vector<8xf32> to vector<8x1xf32>
    %88 = math.log %87 : vector<8x1xf32>
    %89 = arith.addf %82, %88 : vector<8x1xf32>
    %90 = arith.mulf %38, %80 : vector<8x128xf32>
    %91 = arith.addf %73, %90 : vector<8x128xf32>
    %cst_35 = arith.constant 2.000000e+00 : f32
    %92 = vector.broadcast %cst_35 : f32 to vector<8x1xf32>
    %93 = arith.mulf %92, %89 : vector<8x1xf32>
    %94 = arith.addf %76, %93 : vector<8x1xf32>
    %c3 = arith.constant 3 : index
    %c0_36 = arith.constant 0 : index
    %c0_37 = arith.constant 0 : index
    %95 = vector.load %arg1[%c3, %c0_36, %c0_37] : memref<4x8x128xf32, #tpu.memory_space<vmem>>, vector<1x8x128xf32>
    %96 = vector.shape_cast %95 : vector<1x8x128xf32> to vector<8x128xf32>
    %cst_38 = arith.constant 1.000000e+01 : f32
    %97 = vector.broadcast %cst_38 : f32 to vector<8x128xf32>
    %98 = arith.mulf %96, %97 : vector<8x128xf32>
    %cst_39 = arith.constant dense<0xFF800000> : vector<8xf32>
    %99 = vector.multi_reduction <maximumf>, %98, %cst_39 [1] : vector<8x128xf32> to vector<8xf32>
    %100 = vector.shape_cast %99 : vector<8xf32> to vector<8x1xf32>
    %101 = vector.broadcast %100 : vector<8x1xf32> to vector<8x128xf32>
    %102 = arith.subf %98, %101 : vector<8x128xf32>
    %103 = math.exp %102 : vector<8x128xf32>
    %cst_40 = arith.constant dense<0.000000e+00> : vector<8xf32>
    %104 = vector.multi_reduction <add>, %103, %cst_40 [1] : vector<8x128xf32> to vector<8xf32>
    %105 = vector.shape_cast %104 : vector<8xf32> to vector<8x1xf32>
    %106 = math.log %105 : vector<8x1xf32>
    %107 = arith.addf %100, %106 : vector<8x1xf32>
    %108 = arith.mulf %38, %98 : vector<8x128xf32>
    %109 = arith.addf %91, %108 : vector<8x128xf32>
    %cst_41 = arith.constant 2.000000e+00 : f32
    %110 = vector.broadcast %cst_41 : f32 to vector<8x1xf32>
    %111 = arith.mulf %110, %107 : vector<8x1xf32>
    %112 = arith.addf %94, %111 : vector<8x1xf32>
    %cst_42 = arith.constant dense<0.000000e+00> : vector<8xf32>
    %113 = vector.multi_reduction <add>, %109, %cst_42 [1] : vector<8x128xf32> to vector<8xf32>
    %114 = vector.shape_cast %113 : vector<8xf32> to vector<8x1xf32>
    %115 = arith.subf %112, %114 : vector<8x1xf32>
    %c0_43 = arith.constant 0 : index
    %c0_44 = arith.constant 0 : index
    %116 = vector.load %arg6[%c0_43, %c0_44] : memref<1x1xf32, #tpu.memory_space<vmem>>, vector<1x1xf32>
    %cst_45 = arith.constant dense<0.000000e+00> : vector<1xf32>
    %117 = vector.multi_reduction <add>, %115, %cst_45 [0] : vector<8x1xf32> to vector<1xf32>
    %118 = vector.shape_cast %117 : vector<1xf32> to vector<1x1xf32>
    %119 = arith.addf %116, %118 : vector<1x1xf32>
    %c0_46 = arith.constant 0 : index
    %c0_47 = arith.constant 0 : index
    %120 = vector.load %arg6[%c0_46, %c0_47] : memref<1x1xf32, #tpu.memory_space<vmem>>, vector<1x1xf32>
    tpu.vector_store %arg6[%c0_46, %c0_47], %119 {strides = array<i32>} : memref<1x1xf32, #tpu.memory_space<vmem>>, vector<1x1xf32>,
    %c0_48 = arith.constant 0 : index
    %c0_49 = arith.constant 0 : index
    %121 = vector.load %arg7[%c0_48, %c0_49] : memref<1x128xf32, #tpu.memory_space<vmem>>, vector<1x128xf32>
    %cst_50 = arith.constant dense<0.000000e+00> : vector<128xf32>
    %122 = vector.multi_reduction <add>, %5, %cst_50 [0] : vector<8x128xf32> to vector<128xf32>
    %123 = vector.shape_cast %122 : vector<128xf32> to vector<1x128xf32>
    %cst_51 = arith.constant dense<0.000000e+00> : vector<128xf32>
    %124 = vector.multi_reduction <add>, %7, %cst_51 [0] : vector<8x128xf32> to vector<128xf32>
    %125 = vector.shape_cast %124 : vector<128xf32> to vector<1x128xf32>
    %126 = arith.addf %123, %125 : vector<1x128xf32>
    %127 = arith.addf %121, %126 : vector<1x128xf32>
    %c0_52 = arith.constant 0 : index
    %c0_53 = arith.constant 0 : index
    %128 = vector.load %arg7[%c0_52, %c0_53] : memref<1x128xf32, #tpu.memory_space<vmem>>, vector<1x128xf32>
    tpu.vector_store %arg7[%c0_52, %c0_53], %127 {strides = array<i32>} : memref<1x128xf32, #tpu.memory_space<vmem>>, vector<1x128xf32>,
    %c1_i32 = arith.constant 1 : i32
    %129 = arith.cmpi eq, %arg0, %c1_i32 : i32
    %130 = arith.extui %129 : i1 to i32
    %c0_i32_54 = arith.constant 0 : i32
    %131 = arith.cmpi ne, %130, %c0_i32_54 : i32
    scf.if %131 {
      %c0_55 = arith.constant 0 : index
      %c0_56 = arith.constant 0 : index
      %132 = vector.load %arg6[%c0_55, %c0_56] : memref<1x1xf32, #tpu.memory_space<vmem>>, vector<1x1xf32>
      %cst_57 = arith.constant 0.010416667 : f32
      %133 = vector.broadcast %cst_57 : f32 to vector<1x1xf32>
      %134 = arith.mulf %132, %133 : vector<1x1xf32>
      %c0_58 = arith.constant 0 : index
      %c0_59 = arith.constant 0 : index
      %135 = vector.load %arg4[%c0_58, %c0_59] : memref<1x1xf32, #tpu.memory_space<vmem>>, vector<1x1xf32>
      tpu.vector_store %arg4[%c0_58, %c0_59], %134 {strides = array<i32>} : memref<1x1xf32, #tpu.memory_space<vmem>>, vector<1x1xf32>,
      %c0_60 = arith.constant 0 : index
      %c0_61 = arith.constant 0 : index
      %136 = vector.load %arg7[%c0_60, %c0_61] : memref<1x128xf32, #tpu.memory_space<vmem>>, vector<1x128xf32>
      %cst_62 = arith.constant 3.125000e-02 : f32
      %137 = vector.broadcast %cst_62 : f32 to vector<1x128xf32>
      %138 = arith.mulf %136, %137 : vector<1x128xf32>
      %cst_63 = arith.constant 0.899999976 : f32
      %139 = vector.broadcast %cst_63 : f32 to vector<1x128xf32>
      %140 = arith.mulf %3, %139 : vector<1x128xf32>
      %cst_64 = arith.constant 1.000000e-01 : f32
      %141 = vector.broadcast %cst_64 : f32 to vector<1x128xf32>
      %142 = arith.mulf %138, %141 : vector<1x128xf32>
      %143 = arith.addf %140, %142 : vector<1x128xf32>
      %c0_65 = arith.constant 0 : index
      %c0_66 = arith.constant 0 : index
      %144 = vector.load %arg5[%c0_65, %c0_66] : memref<1x128xf32, #tpu.memory_space<vmem>>, vector<1x128xf32>
      tpu.vector_store %arg5[%c0_65, %c0_66], %143 {strides = array<i32>} : memref<1x128xf32, #tpu.memory_space<vmem>>, vector<1x128xf32>,
    } else {
    }
    return
  }
  func.func @transform_0(%arg0: i32) -> (i32, i32, i32) {
    %c0_i32 = arith.constant 0 : i32
    %c0_i32_0 = arith.constant 0 : i32
    %c0_i32_1 = arith.constant 0 : i32
    return %c0_i32, %arg0, %c0_i32_0 : i32, i32, i32
  }
  func.func @transform_1(%arg0: i32) -> (i32, i32, i32) {
    %c0_i32 = arith.constant 0 : i32
    %c0_i32_0 = arith.constant 0 : i32
    %c0_i32_1 = arith.constant 0 : i32
    return %c0_i32, %arg0, %c0_i32_0 : i32, i32, i32
  }
  func.func @transform_2(%arg0: i32) -> (i32, i32) {
    %c0_i32 = arith.constant 0 : i32
    %c0_i32_0 = arith.constant 0 : i32
    %c0_i32_1 = arith.constant 0 : i32
    return %c0_i32, %c0_i32_0 : i32, i32
  }
  func.func @transform_3(%arg0: i32) -> (i32, i32) {
    %c0_i32 = arith.constant 0 : i32
    %c0_i32_0 = arith.constant 0 : i32
    %c0_i32_1 = arith.constant 0 : i32
    return %c0_i32, %c0_i32_0 : i32, i32
  }
  func.func @transform_4(%arg0: i32) -> (i32, i32) {
    %c0_i32 = arith.constant 0 : i32
    %c0_i32_0 = arith.constant 0 : i32
    %c0_i32_1 = arith.constant 0 : i32
    return %c0_i32, %c0_i32_0 : i32, i32
  }
}

</mosaic_0001>

<llo_original>
// kernel: tpu_custom_call.1
$region0: #{tpu_custom_call.1}
  #allocation0 [shape = 'u32[]', space=smem, size = 0x4, offset = 0x4, fixed_abs, tag = 'smem constant byte address 0x4 - core index']
  #allocation1 [shape = 'u32[144,128]{1,0:T(1,128)}', space=vmem, size = 0x12000, scoped, tag = 'internal scratch']
  #allocation2 [shape = 'f32[1,1]{1,0:T(1,128)}', space=vmem, size = 0x200, scoped, tag = 'scratch operand']
  #allocation3 [shape = 'f32[1,128]{1,0:T(1,128)}', space=vmem, size = 0x200, scoped, tag = 'scratch operand']
  %s0 = inlined_call_operand.hbm [shape: f32[4,16,128], index: 0, kind: input, shape index: {}]
  %s1 = inlined_call_operand.hbm [shape: f32[2,16,128], index: 1, kind: input, shape index: {}]
  %s2 = inlined_call_operand.vmem [shape: f32[1,128], index: 2, kind: input, shape index: {}]
  %s3 = inlined_call_operand.hbm [shape: f32[1,1], index: 3, kind: output, shape index: {0}]
  %s4 = inlined_call_operand.hbm [shape: f32[1,128], index: 4, kind: output, shape index: {1}]
  %5 = xla_tuple %s3, %s4
  %s6 = sld [smem:[#allocation0]]
  $region69: #{tpu_custom_call.1} parent=0
    _
  %s8 = ssub.s32 1, %s6
  %s9 = scalar_select 0, %s8, %s6
  $region1: #{tpu_custom_call.1} parent=0
    #allocation4 [shape = 'u8[32768]{0}', space=vmem, size = 0x8000, scoped, tag = 'input window, operand 0']
    #allocation5 [shape = 's32[2]{0}', space=sflag, size = 0x8, scoped, tag = 'scoped memory for tpu_custom_call.1']
    #allocation6 [shape = 's32[2]{0}', space=sflag, size = 0x8, scoped, tag = 'scoped memory for tpu_custom_call.1']
    #allocation7 [shape = 'u8[16384]{0}', space=vmem, size = 0x4000, scoped, tag = 'input window, operand 1']
    #allocation8 [shape = 's32[2]{0}', space=sflag, size = 0x8, scoped, tag = 'scoped memory for tpu_custom_call.1']
    #allocation9 [shape = 'u8[512]{0}', space=vmem, size = 0x400, scoped, tag = 'output window, operand 0, single buffered']
    #allocation10 [shape = 'u8[512]{0}', space=vmem, size = 0x400, scoped, tag = 'output window, operand 1, single buffered']
    #allocation11 [shape = 's32[1]{0}', space=sflag, size = 0x4, scoped, tag = 'scoped memory for tpu_custom_call.1']
    %10 = vsyncpa [#allocation5], 0
    %s11 = scalar_lea.sflag [#allocation5], 1
    %12 = vsyncpa %s11, 0
    %13 = vsyncpa [#allocation8], 0
    %s14 = scalar_lea.sflag [#allocation8], 1
    %15 = vsyncpa %s14, 0
    %16 = vsyncpa [#allocation6], 0
    %17 = vsyncpa [#allocation11], 0
    loop: start=0, step=1, limit=4
    $region2: #{tpu_custom_call.1} parent=1 // loop_pre_header
      _
    $region3: #{tpu_custom_call.1} parent=1 // loop_header
      %s19 = sphi 0, %s23
      %p20 = scmp.ge.s32.totalorder %s19, 4
      %s29 = sphi 0, %s31
      %s32 = sphi 0, %s29
      %s33 = sphi 0, %s32
      %s49 = sphi 0, %s33
      %s55 = sphi 0, %s57
      %s58 = sphi 0, %s55
      %s59 = sphi 0, %s58
      %s75 = sphi 0, %s59
      %s79 = sphi 0, %s79
      %s81 = sphi 0, %s79
      %s82 = sphi 0, %s81
      %s96 = sphi 0, %s82
      %s100 = sphi 0, %s100
      %s102 = sphi 0, %s100
      %s103 = sphi 0, %s102
      %s117 = sphi 0, %s103
      %s121 = sphi 0, %s121
      %s123 = sphi 0, %s121
      %s124 = sphi 0, %s123
      %s138 = sphi 0, %s124
    $region4: #{tpu_custom_call.1} parent=1 // loop_header_branch
      %22 = sbr.rel (%p20) target = $region8
    $region5: #{tpu_custom_call.1} parent=1 // loop_body
      %s24 = ssub.s32 %s19, 1
      %s25 = ssub.s32 %s19, 2
      %s26 = sadd.s32 %s19, 1
      %s27 = ssub.s32 %s19, %s26
      %p28 = scmp.eq.s32.totalorder %s27, 0
      %s30 = sadd.s32 %s29, 1
      %s31 = scalar_select %p28, %s29, %s30
      %p34 = pneg %p28
      %p35 = scmp.eq.s32.totalorder %s19, 1
      %p36 = por %p34, %p35
      %p37 = scmp.ne.s32.totalorder %s29, %s32
      %p38 = scmp.eq.s32.totalorder %s19, 0
      %p39 = por %p37, %p38
      %p40 = scmp.ne.s32.totalorder %s29, %s32
      %p41 = scmp.eq.s32.totalorder %s24, 1
      %p42 = por %p40, %p41
      %p43 = scmp.ne.s32.totalorder %s32, %s33
      %p44 = scmp.eq.s32.totalorder %s24, 0
      %p45 = por %p43, %p44
      %p46 = scmp.ne.s32.totalorder %s32, %s33
      %p47 = scmp.eq.s32.totalorder %s25, 1
      %p48 = por %p46, %p47
      %p50 = scmp.ne.s32.totalorder %s33, %s49
      %p51 = scmp.eq.s32.totalorder %s25, 0
      %p52 = por %p50, %p51
      %s53 = ssub.s32 %s19, %s26
      %p54 = scmp.eq.s32.totalorder %s53, 0
      %s56 = sadd.s32 %s55, 1
      %s57 = scalar_select %p54, %s55, %s56
      %p60 = pneg %p54
      %p61 = scmp.eq.s32.totalorder %s19, 1
      %p62 = por %p60, %p61
      %p63 = scmp.ne.s32.totalorder %s55, %s58
      %p64 = scmp.eq.s32.totalorder %s19, 0
      %p65 = por %p63, %p64
      %p66 = scmp.ne.s32.totalorder %s55, %s58
      %p67 = scmp.eq.s32.totalorder %s24, 1
      %p68 = por %p66, %p67
      %p69 = scmp.ne.s32.totalorder %s58, %s59
      %p70 = scmp.eq.s32.totalorder %s24, 0
      %p71 = por %p69, %p70
      %p72 = scmp.ne.s32.totalorder %s58, %s59
      %p73 = scmp.eq.s32.totalorder %s25, 1
      %p74 = por %p72, %p73
      %p76 = scmp.ne.s32.totalorder %s59, %s75
      %p77 = scmp.eq.s32.totalorder %s25, 0
      %p78 = por %p76, %p77
      %s80 = sadd.s32 %s79, 1
      %p83 = scmp.eq.s32.totalorder %s19, 1
      %p84 = scmp.ne.s32.totalorder %s79, %s81
      %p85 = scmp.eq.s32.totalorder %s19, 0
      %p86 = por %p84, %p85
      %p87 = scmp.ne.s32.totalorder %s79, %s81
      %p88 = scmp.eq.s32.totalorder %s24, 1
      %p89 = por %p87, %p88
      %p90 = scmp.ne.s32.totalorder %s81, %s82
      %p91 = scmp.eq.s32.totalorder %s24, 0
      %p92 = por %p90, %p91
      %p93 = scmp.ne.s32.totalorder %s81, %s82
      %p94 = scmp.eq.s32.totalorder %s25, 1
      %p95 = por %p93, %p94
      %p97 = scmp.ne.s32.totalorder %s82, %s96
      %p98 = scmp.eq.s32.totalorder %s25, 0
      %p99 = por %p97, %p98
      %s101 = sadd.s32 %s100, 1
      %p104 = scmp.eq.s32.totalorder %s19, 1
      %p105 = scmp.ne.s32.totalorder %s100, %s102
      %p106 = scmp.eq.s32.totalorder %s19, 0
      %p107 = por %p105, %p106
      %p108 = scmp.ne.s32.totalorder %s100, %s102
      %p109 = scmp.eq.s32.totalorder %s24, 1
      %p110 = por %p108, %p109
      %p111 = scmp.ne.s32.totalorder %s102, %s103
      %p112 = scmp.eq.s32.totalorder %s24, 0
      %p113 = por %p111, %p112
      %p114 = scmp.ne.s32.totalorder %s102, %s103
      %p115 = scmp.eq.s32.totalorder %s25, 1
      %p116 = por %p114, %p115
      %p118 = scmp.ne.s32.totalorder %s103, %s117
      %p119 = scmp.eq.s32.totalorder %s25, 0
      %p120 = por %p118, %p119
      %s122 = sadd.s32 %s121, 1
      %p125 = scmp.eq.s32.totalorder %s19, 1
      %p126 = scmp.ne.s32.totalorder %s121, %s123
      %p127 = scmp.eq.s32.totalorder %s19, 0
      %p128 = por %p126, %p127
      %p129 = scmp.ne.s32.totalorder %s121, %s123
      %p130 = scmp.eq.s32.totalorder %s24, 1
      %p131 = por %p129, %p130
      %p132 = scmp.ne.s32.totalorder %s123, %s124
      %p133 = scmp.eq.s32.totalorder %s24, 0
      %p134 = por %p132, %p133
      %p135 = scmp.ne.s32.totalorder %s123, %s124
      %p136 = scmp.eq.s32.totalorder %s25, 1
      %p137 = por %p135, %p136
      %p139 = scmp.ne.s32.totalorder %s124, %s138
      %p140 = scmp.eq.s32.totalorder %s25, 0
      %p141 = por %p139, %p140
      %p142 = scmp.le.s32.totalorder 1, %s19
      %p143 = scmp.lt.s32.totalorder %s19, 3
      %p144 = pnand %p142, %p143
      %p145 = pneg %p144
      // Predicated region
      $region9: #{tpu_custom_call.1} parent=5 // pred_check
        _
      $region10: #{tpu_custom_call.1} parent=5 // pred_check_branch
        %147 = sbr.rel (%p144) target = $region12
      $region11: #{tpu_custom_call.1} parent=5 // pred_region
        %s148 = ssub.s32 %s19, 1
        // Predicated region
        $region13: #{tpu_custom_call.1} parent=11 // pred_check
          %p149 = pneg %p92
        $region14: #{tpu_custom_call.1} parent=11 // pred_check_branch
          %151 = sbr.rel (%p149) target = $region16
        $region15: #{tpu_custom_call.1} parent=11 // pred_region
          _
        $region16: #{tpu_custom_call.1} parent=11 // pred_fallthru
          _
      $region12: #{tpu_custom_call.1} parent=5 // pred_fallthru
        _
      %p152 = scmp.lt.s32.totalorder %s19, 2
      // Predicated region
      $region17: #{tpu_custom_call.1} parent=5 // pred_check
        %p153 = pneg %p152
      $region18: #{tpu_custom_call.1} parent=5 // pred_check_branch
        %155 = sbr.rel (%p153) target = $region20
      $region19: #{tpu_custom_call.1} parent=5 // pred_region
        // Predicated region
        $region21: #{tpu_custom_call.1} parent=19 // pred_check
          %p156 = pneg %p39
        $region22: #{tpu_custom_call.1} parent=19 // pred_check_branch
          %158 = sbr.rel (%p156) target = $region24
        $region23: #{tpu_custom_call.1} parent=19 // pred_region
          %s159 = sand.u32 %s29, 1
          %s160 = scalar_lea.sflag [#allocation5], %s159
          %s161 = sand.u32 %s29, 1
          %s162 = smul.addr %s161, 32
          %s163 = scalar_lea.vmem [#allocation4], %s162
          %s165 = ssub.s32 512, 512
          %166 = vsyncadd %s160, %s165
          %s167 = smul.addr %s19, 128
          %s168 = scalar_lea.hbm %s0, %s167
          %s169 = sshll.u32 %s163, 4
          %s170 = int_to_ptr.vmem [resolvable:$true] %s169
          %175 = dma.hbm_to_vmem [thread:$0]  %s168, 512, %s170, %s160, 256, 128, 8
        $region24: #{tpu_custom_call.1} parent=19 // pred_fallthru
          _
        // Predicated region
        $region25: #{tpu_custom_call.1} parent=19 // pred_check
          %p176 = pneg %p65
        $region26: #{tpu_custom_call.1} parent=19 // pred_check_branch
          %178 = sbr.rel (%p176) target = $region28
        $region27: #{tpu_custom_call.1} parent=19 // pred_region
          %s179 = sand.u32 %s55, 1
          %s180 = scalar_lea.sflag [#allocation8], %s179
          %s181 = sand.u32 %s55, 1
          %s182 = smul.addr %s181, 16
          %s183 = scalar_lea.vmem [#allocation7], %s182
          %s185 = ssub.s32 256, 256
          %186 = vsyncadd %s180, %s185
          %s187 = smul.addr %s19, 128
          %s188 = scalar_lea.hbm %s1, %s187
          %s189 = sshll.u32 %s183, 4
          %s190 = int_to_ptr.vmem [resolvable:$true] %s189
          %195 = dma.hbm_to_vmem [thread:$0]  %s188, 256, %s190, %s180, 256, 128, 8
        $region28: #{tpu_custom_call.1} parent=19 // pred_fallthru
          _
      $region20: #{tpu_custom_call.1} parent=5 // pred_fallthru
        _
      %p196 = scmp.le.s32.totalorder 1, %s19
      %p197 = scmp.lt.s32.totalorder %s19, 3
      %p198 = pnand %p196, %p197
      %p199 = pneg %p198
      // Predicated region
      $region29: #{tpu_custom_call.1} parent=5 // pred_check
        _
      $region30: #{tpu_custom_call.1} parent=5 // pred_check_branch
        %201 = sbr.rel (%p198) target = $region32
      $region31: #{tpu_custom_call.1} parent=5 // pred_region
        %s202 = ssub.s32 %s19, 1
        %s203 = sand.u32 %s32, 1
        %s204 = scalar_lea.sflag [#allocation5], %s203
        %s205 = sand.u32 %s32, 1
        %s206 = smul.addr %s205, 32
        %s207 = scalar_lea.vmem [#allocation4], %s206
        // Predicated region
        $region33: #{tpu_custom_call.1} parent=31 // pred_check
          %p208 = pneg %p45
        $region34: #{tpu_custom_call.1} parent=31 // pred_check_branch
          %210 = sbr.rel (%p208) target = $region36
        $region35: #{tpu_custom_call.1} parent=31 // pred_region
          %211 = dma.done %s204, 512
        $region36: #{tpu_custom_call.1} parent=31 // pred_fallthru
          _
        %s212 = sand.u32 %s58, 1
        %s213 = scalar_lea.sflag [#allocation8], %s212
        %s214 = sand.u32 %s58, 1
        %s215 = smul.addr %s214, 16
        %s216 = scalar_lea.vmem [#allocation7], %s215
        // Predicated region
        $region37: #{tpu_custom_call.1} parent=31 // pred_check
          %p217 = pneg %p71
        $region38: #{tpu_custom_call.1} parent=31 // pred_check_branch
          %219 = sbr.rel (%p217) target = $region40
        $region39: #{tpu_custom_call.1} parent=31 // pred_region
          %220 = dma.done %s213, 256
        $region40: #{tpu_custom_call.1} parent=31 // pred_fallthru
          _
        %s221 = sand.u32 %s32, 1
        %s222 = scalar_lea.sflag [#allocation5], %s221
        %s223 = sand.u32 %s32, 1
        %s224 = smul.addr %s223, 32
        %s225 = scalar_lea.vmem [#allocation4], %s224
        %p226 = pneg %p45
        %p227 = pneg %p42
        %s228 = sand.u32 %s58, 1
        %s229 = scalar_lea.sflag [#allocation8], %s228
        %s230 = sand.u32 %s58, 1
        %s231 = smul.addr %s230, 16
        %s232 = scalar_lea.vmem [#allocation7], %s231
        %p233 = pneg %p71
        %p234 = pneg %p68
        %p235 = pneg %p92
        %p236 = pneg %p89
        %p237 = pneg %p113
        %p238 = pneg %p110
        %p239 = pneg %p134
        %p240 = pneg %p131
        %p241 = scmp.eq.s32.totalorder %s24, 0
        // Predicated region
        $region41: #{tpu_custom_call.1} parent=31 // pred_check
          %p242 = pneg %p241
        $region42: #{tpu_custom_call.1} parent=31 // pred_check_branch
          %244 = sbr.rel (%p242) target = $region44
        $region43: #{tpu_custom_call.1} parent=31 // pred_region
          %vm245 = vcmask 0
          %246 = vst.msk [vmem:[#allocation2] sm:$0x1] %vm245, 0.0
          %247 = vst [vmem:[#allocation3] sm:$0x1] 0.0
        $region44: #{tpu_custom_call.1} parent=31 // pred_fallthru
          _
        %v248 = vld [vmem:[%s2] sm:$0x1]
        %v249 = vld [vmem:[%s216] sm:$0xff]
        %s250 = scalar_lea.vmem %s216, 8 [#allocation7]
        %v251 = vld [vmem:[%s250] sm:$0xff]
        %v253 = vlaneseq
        %v254 = vshrl.u32 %v253, 7
        %v255 = vsub.s32 0, %v254
        %v256 = vrot.slane %v248, %v255
        %v258 = vsub.f32 %v249, %v256
        %v259 = vmul.f32 %v258, 18.181818
        %260 = vmax.xlane.f32.xlu0 %v259
        %v261 = vpop.xlane.xlu0 %260
        %v262 = vsub.f32 %v259, %v261
        %v263 = vmul.f32 %v262, 1.442695
        %v264 = vpow.pop %v263
        %265 = vadd.xlane.f32.xlu0 %v264
        %v266 = vpop.xlane.xlu0 %265
        %v267 = vrcp.pop %v266
        %v268 = vmul.f32 1.0, %v267
        %v269 = vmul.f32 %v264, %v268
        %v270 = vsub.f32 %v251, %v256
        %v271 = vmul.f32 %v270, 18.181818
        %272 = vmax.xlane.f32.xlu0 %v271
        %v273 = vpop.xlane.xlu0 %272
        %v274 = vsub.f32 %v271, %v273
        %v275 = vmul.f32 %v274, 1.442695
        %v276 = vpow.pop %v275
        %277 = vadd.xlane.f32.xlu0 %v276
        %v278 = vpop.xlane.xlu0 %277
        %v279 = vrcp.pop %v278
        %v280 = vmul.f32 1.0, %v279
        %v281 = vmul.f32 %v276, %v280
        %v282 = vadd.f32 %v269, %v281
        %v283 = vld [vmem:[%s207] sm:$0xff]
        %v284 = vmul.f32 %v283, 10.0
        %285 = vmax.xlane.f32.xlu0 %v284
        %v286 = vpop.xlane.xlu0 %285
        %v287 = vsub.f32 %v284, %v286
        %v288 = vmul.f32 %v287, 1.442695
        %v289 = vpow.pop %v288
        %290 = vadd.xlane.f32.xlu0 %v289
        %v291 = vpop.xlane.xlu0 %290
        %v292 = vlog2.pop %v291
        %v293 = vmul.f32 %v292, 0.6931472
        %v294 = vadd.f32 %v286, %v293
        %v295 = vmul.f32 %v281, %v284
        %v296 = vadd.f32 %v295, 0.0
        %v297 = vadd.f32 %v294, 0.0
        %s298 = scalar_lea.vmem %s207, 8 [#allocation4]
        %v299 = vld [vmem:[%s298] sm:$0xff]
        %v300 = vmul.f32 %v299, 10.0
        %301 = vmax.xlane.f32.xlu0 %v300
        %v302 = vpop.xlane.xlu0 %301
        %v303 = vsub.f32 %v300, %v302
        %v304 = vmul.f32 %v303, 1.442695
        %v305 = vpow.pop %v304
        %306 = vadd.xlane.f32.xlu0 %v305
        %v307 = vpop.xlane.xlu0 %306
        %v308 = vlog2.pop %v307
        %v309 = vmul.f32 %v308, 0.6931472
        %v310 = vadd.f32 %v302, %v309
        %v311 = vmul.f32 %v269, %v300
        %v312 = vadd.f32 %v296, %v311
        %v313 = vadd.f32 %v297, %v310
        %s314 = scalar_lea.vmem %s207, 16 [#allocation4]
        %v315 = vld [vmem:[%s314] sm:$0xff]
        %v316 = vmul.f32 %v315, 10.0
        %317 = vmax.xlane.f32.xlu0 %v316
        %v318 = vpop.xlane.xlu0 %317
        %v319 = vsub.f32 %v316, %v318
        %v320 = vmul.f32 %v319, 1.442695
        %v321 = vpow.pop %v320
        %322 = vadd.xlane.f32.xlu0 %v321
        %v323 = vpop.xlane.xlu0 %322
        %v324 = vlog2.pop %v323
        %v325 = vmul.f32 %v324, 0.6931472
        %v326 = vadd.f32 %v318, %v325
        %v327 = vmul.f32 %v282, %v316
        %v328 = vadd.f32 %v312, %v327
        %v329 = vmul.f32 %v326, 2.0
        %v330 = vadd.f32 %v313, %v329
        %s331 = scalar_lea.vmem %s207, 24 [#allocation4]
        %v332 = vld [vmem:[%s331] sm:$0xff]
        %v333 = vmul.f32 %v332, 10.0
        %334 = vmax.xlane.f32.xlu0 %v333
        %v335 = vpop.xlane.xlu0 %334
        %v336 = vsub.f32 %v333, %v335
        %v337 = vmul.f32 %v336, 1.442695
        %v338 = vpow.pop %v337
        %339 = vadd.xlane.f32.xlu0 %v338
        %v340 = vpop.xlane.xlu0 %339
        %v341 = vlog2.pop %v340
        %v342 = vmul.f32 %v341, 0.6931472
        %v343 = vadd.f32 %v335, %v342
        %v344 = vmul.f32 %v282, %v333
        %v345 = vadd.f32 %v328, %v344
        %v346 = vmul.f32 %v343, 2.0
        %v347 = vadd.f32 %v330, %v346
        %348 = vadd.xlane.f32.xlu0 %v345
        %v349 = vpop.xlane.xlu0 %348
        %v350 = vsub.f32 %v347, %v349
        %v351 = vld [vmem:[#allocation2] sm:$0x1]
        %v352 = vrot.slane %v350, 4
        %v353 = vadd.f32 %v350, %v352
        %v354 = vrot.slane %v353, 2
        %v355 = vadd.f32 %v353, %v354
        %v356 = vrot.slane %v355, 1
        %v357 = vadd.f32 %v355, %v356
        %v358 = vadd.f32 %v351, %v357
        %vm359 = vcmask 0
        %360 = vst.msk [vmem:[#allocation2] sm:$0x1] %vm359, %v358
        %v361 = vld [vmem:[#allocation3] sm:$0x1]
        %v362 = vrot.slane %v249, 4
        %v363 = vadd.f32 %v249, %v362
        %v364 = vrot.slane %v363, 2
        %v365 = vadd.f32 %v363, %v364
        %v366 = vrot.slane %v365, 1
        %v367 = vadd.f32 %v365, %v366
        %v368 = vrot.slane %v251, 4
        %v369 = vadd.f32 %v251, %v368
        %v370 = vrot.slane %v369, 2
        %v371 = vadd.f32 %v369, %v370
        %v372 = vrot.slane %v371, 1
        %v373 = vadd.f32 %v371, %v372
        %v374 = vadd.f32 %v367, %v373
        %v375 = vadd.f32 %v361, %v374
        %376 = vst [vmem:[#allocation3] sm:$0x1] %v375
        %p377 = scmp.eq.s32.totalorder %s24, 1
        // Predicated region
        $region45: #{tpu_custom_call.1} parent=31 // pred_check
          %p378 = pneg %p377
        $region46: #{tpu_custom_call.1} parent=31 // pred_check_branch
          %380 = sbr.rel (%p378) target = $region48
        $region47: #{tpu_custom_call.1} parent=31 // pred_region
          %v381 = vld [vmem:[#allocation2] sm:$0x1]
          %v382 = vmul.f32 %v381, 0.010416667
          %383 = vst.msk [vmem:[#allocation9] sm:$0x1] %vm359, %v382
          %v384 = vld [vmem:[#allocation3] sm:$0x1]
          %v385 = vmul.f32 %v384, 0.03125
          %v386 = vmul.f32 %v248, 0.9
          %v387 = vmul.f32 %v385, 0.1
          %v388 = vadd.f32 %v386, %v387
          %389 = vst [vmem:[#allocation10] sm:$0x1] %v388
        $region48: #{tpu_custom_call.1} parent=31 // pred_fallthru
          _
        // Predicated region
        $region49: #{tpu_custom_call.1} parent=31 // pred_check
          %p390 = pneg %p110
        $region50: #{tpu_custom_call.1} parent=31 // pred_check_branch
          %392 = sbr.rel (%p390) target = $region52
        $region51: #{tpu_custom_call.1} parent=31 // pred_region
          %s394 = ssub.s32 16, 16
          %395 = vsyncadd [#allocation6], %s394
          %s397 = sshll.u32 [#allocation9], 4
          %s398 = int_to_ptr.vmem [resolvable:$true] %s397
          %400 = dma.vmem_to_hbm [thread:$0]  %s398, 16, %s3, [#allocation6]
        $region52: #{tpu_custom_call.1} parent=31 // pred_fallthru
          _
        // Predicated region
        $region53: #{tpu_custom_call.1} parent=31 // pred_check
          %p401 = pneg %p131
        $region54: #{tpu_custom_call.1} parent=31 // pred_check_branch
          %403 = sbr.rel (%p401) target = $region56
        $region55: #{tpu_custom_call.1} parent=31 // pred_region
          %s405 = ssub.s32 16, 16
          %406 = vsyncadd [#allocation11], %s405
          %s408 = sshll.u32 [#allocation10], 4
          %s409 = int_to_ptr.vmem [resolvable:$true] %s408
          %411 = dma.vmem_to_hbm [thread:$0]  %s409, 16, %s4, [#allocation11]
        $region56: #{tpu_custom_call.1} parent=31 // pred_fallthru
          _
        // Predicated region
        $region57: #{tpu_custom_call.1} parent=31 // pred_check
          %p412 = pneg %p110
        $region58: #{tpu_custom_call.1} parent=31 // pred_check_branch
          %414 = sbr.rel (%p412) target = $region60
        $region59: #{tpu_custom_call.1} parent=31 // pred_region
          %415 = dma.done [#allocation6], 16
        $region60: #{tpu_custom_call.1} parent=31 // pred_fallthru
          _
        // Predicated region
        $region61: #{tpu_custom_call.1} parent=31 // pred_check
          %p416 = pneg %p131
        $region62: #{tpu_custom_call.1} parent=31 // pred_check_branch
          %418 = sbr.rel (%p416) target = $region64
        $region63: #{tpu_custom_call.1} parent=31 // pred_region
          %419 = dma.done [#allocation11], 16
        $region64: #{tpu_custom_call.1} parent=31 // pred_fallthru
          _
      $region32: #{tpu_custom_call.1} parent=5 // pred_fallthru
        _
      %p420 = scmp.le.s32.totalorder 2, %s19
      // Predicated region
      $region65: #{tpu_custom_call.1} parent=5 // pred_check
        %p421 = pneg %p420
      $region66: #{tpu_custom_call.1} parent=5 // pred_check_branch
        %423 = sbr.rel (%p421) target = $region68
      $region67: #{tpu_custom_call.1} parent=5 // pred_region
        %s424 = ssub.s32 %s19, 2
      $region68: #{tpu_custom_call.1} parent=5 // pred_fallthru
        _
    $region6: #{tpu_custom_call.1} parent=1 // loop_footer
      %s23 = sadd.s32 1, %s19
    $region7: #{tpu_custom_call.1} parent=1 // loop_footer_branch
      %18 = sbr.rel target = $region3
    $region8: #{tpu_custom_call.1} parent=1 // loop_exit
      _
    %425 = vsyncpa [#allocation5], 1
    %s426 = scalar_lea.sflag [#allocation5], 1
    %427 = vsyncpa %s426, 1
    %428 = vsyncpa [#allocation8], 1
    %s429 = scalar_lea.sflag [#allocation8], 1
    %430 = vsyncpa %s429, 1
    %431 = vsyncpa [#allocation6], 1
    %s432 = scalar_lea.sflag [#allocation6], 1
    %433 = vsyncpa %s432, 1
    %434 = vsyncpa [#allocation11], 1

</llo_original>
